<compile_context>
chip_gen: v7x
topology: tpu7x:2x2x1
jax: 0.10.0
libtpu: 0.0.40
codegen_flags: <defaults>
</compile_context>

<pallas_src>
import jax
import jax.numpy as jnp
from jax import lax
from jax.experimental import pallas as pl
from jax.experimental.pallas import tpu as pltpu

_LANES = 128
_SUBLANES = 8
_NUM_CORES = 2                        # leading "parallel" grid axis (v7x megacore)
_VMEM_INPUT_BUDGET = 8 * 1024 * 1024  # double-buffered input bytes (v5e-safe)


def _round_up(x, m):
    return ((x + m - 1) // m) * m


def _make_bce_kernel(num_heads, tile_r, inner, n_valid):
    """Fused BCE-with-logits partial-sum kernel: num_heads logits, one target."""

    def kernel(*refs):
        x_refs = refs[:num_heads]
        y_ref = refs[num_heads]
        out_refs = refs[num_heads + 1:]         # each (1, 1, 128) f32, VMEM-resident

        c = pl.program_id(0)                    # parallel (core) axis
        i = pl.program_id(1)                    # sequential reduction axis

        @pl.when(i == 0)
        def _():
            for o in out_refs:
                o[...] = jnp.zeros_like(o)

        # Mask the tail of the last row-block and any clamped duplicate block.
        block_idx = c * inner + i
        base = block_idx * (tile_r * _LANES)
        row_ids = lax.broadcasted_iota(jnp.int32, (tile_r, _LANES), 0)
        lane_ids = lax.broadcasted_iota(jnp.int32, (tile_r, _LANES), 1)
        in_bounds = (base + row_ids * _LANES + lane_ids) < n_valid

        y = y_ref[...].astype(jnp.float32)
        for h, x_ref in enumerate(x_refs):
            x = x_ref[...].astype(jnp.float32)
            # Numerically stable BCE-with-logits (== torch.nn.BCEWithLogitsLoss).
            loss = jnp.maximum(x, 0.0) - x * y + jnp.log1p(jnp.exp(-jnp.abs(x)))
            loss = jnp.where(in_bounds, loss, 0.0)
            # Per-lane partial sums: VPU-only adds into the resident output block.
            out_refs[h][...] += jnp.sum(loss, axis=0, keepdims=True)[None]

    return kernel


def _fused_bce_sums(logits_list, target):
    """Per-head elementwise-sum of BCE-with-logits loss; returns (num_heads,) f32."""
    num_heads = len(logits_list)
    n = int(target.size)

    def as_rows(a):
        assert a.shape == target.shape
        flat = a.reshape(-1)
        pad = (-n) % _LANES
        if pad:  # rare; padded tail is masked in-kernel so the pad value is irrelevant
            flat = jnp.pad(flat, (0, pad))
        return flat.reshape(-1, _LANES)

    xs = [as_rows(x) for x in logits_list]
    y = as_rows(target)
    rows = y.shape[0]

    # Largest row-block keeping all double-buffered inputs within the budget.
    bytes_per_row = (num_heads + 1) * 2 * _LANES * 4
    budget_rows = max(
        _SUBLANES,
        (_VMEM_INPUT_BUDGET // bytes_per_row) // _SUBLANES * _SUBLANES,
    )
    tile_r = min(budget_rows, _round_up(rows, _SUBLANES))

    n_blocks = pl.cdiv(rows, tile_r)
    inner = pl.cdiv(n_blocks, _NUM_CORES)
    grid = (_NUM_CORES, inner)

    def in_map(c, i):
        # Clamp so a duplicated trailing block stays in bounds; its elements
        # are fully masked inside the kernel.
        return (jnp.minimum(c * inner + i, n_blocks - 1), 0)

    in_specs = [pl.BlockSpec((tile_r, _LANES), in_map)
                for _ in range(num_heads + 1)]
    out_specs = [pl.BlockSpec((1, 1, _LANES), lambda c, i: (c, 0, 0))
                 for _ in range(num_heads)]
    out_shape = tuple(
        jax.ShapeDtypeStruct((_NUM_CORES, 1, _LANES), jnp.float32)
        for _ in range(num_heads)
    )

    in_bytes = (sum(int(x.dtype.itemsize) for x in logits_list)
                + int(target.dtype.itemsize)) * n
    cost = pl.CostEstimate(
        flops=5 * n * num_heads,
        transcendentals=2 * n * num_heads,
        bytes_accessed=in_bytes + _NUM_CORES * num_heads * _LANES * 4,
    )

    results = pl.pallas_call(
        _make_bce_kernel(num_heads, tile_r, inner, n),
        out_shape=out_shape,
        grid_spec=pltpu.PrefetchScalarGridSpec(
            num_scalar_prefetch=0,
            grid=grid,
            in_specs=in_specs,
            out_specs=out_specs,
        ),
        compiler_params=pltpu.CompilerParams(
            dimension_semantics=("parallel", "arbitrary")),
        cost_estimate=cost,
    )(*xs, y)

    if not isinstance(results, (tuple, list)):
        results = (results,)
    return jnp.stack([jnp.sum(r) for r in results])


def bce_loss(pred, aux_outputs, target):
    """Pallas equivalent of BCELoss.forward(pred, aux_outputs, target)."""
    if aux_outputs is None:
        heads = (pred,)
    else:
        heads = (pred,) + tuple(aux_outputs)
    sums = _fused_bce_sums(heads, target)
    means = sums / jnp.float32(target.size)
    if aux_outputs is None:
        return means[0]
    return means[0] + jnp.float32(0.4) * jnp.sum(means[1:])


def _reference(pred, aux_outputs, target):
    """Pure-JAX reference for self-check."""
    def bce(x, y):
        x = x.astype(jnp.float32)
        y = y.astype(jnp.float32)
        l = jnp.maximum(x, 0.0) - x * y + jnp.log1p(jnp.exp(-jnp.abs(x)))
        return jnp.mean(l)
    main = bce(pred, target)
    if aux_outputs is None:
        return main
    return main + 0.4 * sum(bce(a, target) for a in aux_outputs)


if __name__ == "__main__":
    key = jax.random.PRNGKey(0)
    k1, k2, k3, k4 = jax.random.split(key, 4)

    # NCHW-shaped inputs, as the PyTorch module would receive.
    N, C, H, W = 2, 4, 16, 16
    pred = jax.random.normal(k1, (N, C, H, W), jnp.float32)
    target = (jax.random.uniform(k2, (N, C, H, W)) > 0.5).astype(jnp.float32)
    aux_outputs = (
        jax.random.normal(k3, (N, C, H, W), jnp.float32),
        jax.random.normal(k4, (N, C, H, W), jnp.float32),
    )

    out = jax.block_until_ready(bce_loss(pred, aux_outputs, target))
    ref = _reference(pred, aux_outputs, target)
    assert jnp.allclose(out, ref, rtol=1e-5, atol=1e-5), (out, ref)

    # aux_outputs is None path
    out_none = jax.block_until_ready(bce_loss(pred, None, target))
    ref_none = _reference(pred, None, target)
    assert jnp.allclose(out_none, ref_none, rtol=1e-5, atol=1e-5), (out_none, ref_none)

    print("KERNEL_OK")
</pallas_src>

<mosaic_0001>
module attributes {stable_mosaic.version = 11 : i64} {
  func.func @kernel(%arg0: i32, %arg1: i32, %arg2: memref<16x128xf32, #tpu.memory_space<vmem>>, %arg3: memref<16x128xf32, #tpu.memory_space<vmem>>, %arg4: memref<16x128xf32, #tpu.memory_space<vmem>>, %arg5: memref<16x128xf32, #tpu.memory_space<vmem>>, %arg6: memref<1x1x128xf32, #tpu.memory_space<vmem>>, %arg7: memref<1x1x128xf32, #tpu.memory_space<vmem>>, %arg8: memref<1x1x128xf32, #tpu.memory_space<vmem>>) attributes {dimension_semantics = [#tpu.dimension_semantics<parallel>, #tpu.dimension_semantics<arbitrary>], iteration_bounds = array<i64: 2, 1>, scalar_prefetch = 0 : i64, scratch_operands = 0 : i64, tpu.core_type = #tpu.core_type<tc>, window_params = [{transform_indices = @transform_0, window_bounds = array<i64: 16, 128>}, {transform_indices = @transform_1, window_bounds = array<i64: 16, 128>}, {transform_indices = @transform_2, window_bounds = array<i64: 16, 128>}, {transform_indices = @transform_3, window_bounds = array<i64: 16, 128>}, {transform_indices = @transform_4, window_bounds = array<i64: 1, 1, 128>}, {transform_indices = @transform_5, window_bounds = array<i64: 1, 1, 128>}, {transform_indices = @transform_6, window_bounds = array<i64: 1, 1, 128>}]} {
    %c0_i32 = arith.constant 0 : i32
    %0 = arith.cmpi eq, %arg1, %c0_i32 : i32
    %1 = arith.extui %0 : i1 to i32
    %c0_i32_0 = arith.constant 0 : i32
    %2 = arith.cmpi ne, %1, %c0_i32_0 : i32
    scf.if %2 {
      %cst_38 = arith.constant 0.000000e+00 : f32
      %73 = vector.broadcast %cst_38 : f32 to vector<1x1x128xf32>
      %c0_39 = arith.constant 0 : index
      %c0_40 = arith.constant 0 : index
      %c0_41 = arith.constant 0 : index
      %74 = vector.load %arg6[%c0_39, %c0_40, %c0_41] : memref<1x1x128xf32, #tpu.memory_space<vmem>>, vector<1x1x128xf32>
      tpu.vector_store %arg6[%c0_39, %c0_40, %c0_41], %73 {strides = array<i32>} : memref<1x1x128xf32, #tpu.memory_space<vmem>>, vector<1x1x128xf32>,
      %cst_42 = arith.constant 0.000000e+00 : f32
      %75 = vector.broadcast %cst_42 : f32 to vector<1x1x128xf32>
      %c0_43 = arith.constant 0 : index
      %c0_44 = arith.constant 0 : index
      %c0_45 = arith.constant 0 : index
      %76 = vector.load %arg7[%c0_43, %c0_44, %c0_45] : memref<1x1x128xf32, #tpu.memory_space<vmem>>, vector<1x1x128xf32>
      tpu.vector_store %arg7[%c0_43, %c0_44, %c0_45], %75 {strides = array<i32>} : memref<1x1x128xf32, #tpu.memory_space<vmem>>, vector<1x1x128xf32>,
      %cst_46 = arith.constant 0.000000e+00 : f32
      %77 = vector.broadcast %cst_46 : f32 to vector<1x1x128xf32>
      %c0_47 = arith.constant 0 : index
      %c0_48 = arith.constant 0 : index
      %c0_49 = arith.constant 0 : index
      %78 = vector.load %arg8[%c0_47, %c0_48, %c0_49] : memref<1x1x128xf32, #tpu.memory_space<vmem>>, vector<1x1x128xf32>
      tpu.vector_store %arg8[%c0_47, %c0_48, %c0_49], %77 {strides = array<i32>} : memref<1x1x128xf32, #tpu.memory_space<vmem>>, vector<1x1x128xf32>,
    } else {
    }
    %c1_i32 = arith.constant 1 : i32
    %3 = arith.muli %arg0, %c1_i32 : i32
    %4 = arith.addi %3, %arg1 : i32
    %c2048_i32 = arith.constant 2048 : i32
    %5 = arith.muli %4, %c2048_i32 : i32
    %6 = tpu.iota {dimensions = array<i32: 0>} : vector<16x128xi32>
    %7 = tpu.iota {dimensions = array<i32: 1>} : vector<16x128xi32>
    %c128_i32 = arith.constant 128 : i32
    %8 = vector.broadcast %c128_i32 : i32 to vector<16x128xi32>
    %9 = arith.muli %6, %8 : vector<16x128xi32>
    %10 = vector.broadcast %5 : i32 to vector<16x128xi32>
    %11 = arith.addi %10, %9 : vector<16x128xi32>
    %12 = arith.addi %11, %7 : vector<16x128xi32>
    %c2048_i32_1 = arith.constant 2048 : i32
    %13 = vector.broadcast %c2048_i32_1 : i32 to vector<16x128xi32>
    %14 = arith.cmpi slt, %12, %13 : vector<16x128xi32>
    %c0 = arith.constant 0 : index
    %c0_2 = arith.constant 0 : index
    %15 = vector.load %arg5[%c0, %c0_2] : memref<16x128xf32, #tpu.memory_space<vmem>>, vector<16x128xf32>
    %c0_3 = arith.constant 0 : index
    %c0_4 = arith.constant 0 : index
    %16 = vector.load %arg2[%c0_3, %c0_4] : memref<16x128xf32, #tpu.memory_space<vmem>>, vector<16x128xf32>
    %cst = arith.constant 0.000000e+00 : f32
    %17 = vector.broadcast %cst : f32 to vector<16x128xf32>
    %18 = arith.maximumf %16, %17 : vector<16x128xf32>
    %19 = arith.mulf %16, %15 : vector<16x128xf32>
    %20 = arith.subf %18, %19 : vector<16x128xf32>
    %21 = math.absf %16 : vector<16x128xf32>
    %cst_5 = arith.constant 0.000000e+00 : f32
    %22 = vector.broadcast %cst_5 : f32 to vector<16x128xf32>
    %23 = arith.subf %22, %21 : vector<16x128xf32>
    %24 = math.exp %23 : vector<16x128xf32>
    %25 = math.log1p %24 : vector<16x128xf32>
    %26 = arith.addf %20, %25 : vector<16x128xf32>
    %cst_6 = arith.constant 0.000000e+00 : f32
    %27 = vector.broadcast %cst_6 : f32 to vector<16x128xf32>
    %28 = arith.select %14, %26, %27 : vector<16x128xi1>, vector<16x128xf32>
    %c0_7 = arith.constant 0 : index
    %c0_8 = arith.constant 0 : index
    %c0_9 = arith.constant 0 : index
    %29 = vector.load %arg6[%c0_7, %c0_8, %c0_9] : memref<1x1x128xf32, #tpu.memory_space<vmem>>, vector<1x1x128xf32>
    %cst_10 = arith.constant dense<0.000000e+00> : vector<128xf32>
    %30 = vector.multi_reduction <add>, %28, %cst_10 [0] : vector<16x128xf32> to vector<128xf32>
    %31 = vector.shape_cast %30 : vector<128xf32> to vector<1x128xf32>
    %32 = vector.shape_cast %31 : vector<1x128xf32> to vector<1x1x128xf32>
    %33 = arith.addf %29, %32 : vector<1x1x128xf32>
    %c0_11 = arith.constant 0 : index
    %c0_12 = arith.constant 0 : index
    %c0_13 = arith.constant 0 : index
    %34 = vector.load %arg6[%c0_11, %c0_12, %c0_13] : memref<1x1x128xf32, #tpu.memory_space<vmem>>, vector<1x1x128xf32>
    tpu.vector_store %arg6[%c0_11, %c0_12, %c0_13], %33 {strides = array<i32>} : memref<1x1x128xf32, #tpu.memory_space<vmem>>, vector<1x1x128xf32>,
    %c0_14 = arith.constant 0 : index
    %c0_15 = arith.constant 0 : index
    %35 = vector.load %arg3[%c0_14, %c0_15] : memref<16x128xf32, #tpu.memory_space<vmem>>, vector<16x128xf32>
    %cst_16 = arith.constant 0.000000e+00 : f32
    %36 = vector.broadcast %cst_16 : f32 to vector<16x128xf32>
    %37 = arith.maximumf %35, %36 : vector<16x128xf32>
    %38 = arith.mulf %35, %15 : vector<16x128xf32>
    %39 = arith.subf %37, %38 : vector<16x128xf32>
    %40 = math.absf %35 : vector<16x128xf32>
    %cst_17 = arith.constant 0.000000e+00 : f32
    %41 = vector.broadcast %cst_17 : f32 to vector<16x128xf32>
    %42 = arith.subf %41, %40 : vector<16x128xf32>
    %43 = math.exp %42 : vector<16x128xf32>
    %44 = math.log1p %43 : vector<16x128xf32>
    %45 = arith.addf %39, %44 : vector<16x128xf32>
    %cst_18 = arith.constant 0.000000e+00 : f32
    %46 = vector.broadcast %cst_18 : f32 to vector<16x128xf32>
    %47 = arith.select %14, %45, %46 : vector<16x128xi1>, vector<16x128xf32>
    %c0_19 = arith.constant 0 : index
    %c0_20 = arith.constant 0 : index
    %c0_21 = arith.constant 0 : index
    %48 = vector.load %arg7[%c0_19, %c0_20, %c0_21] : memref<1x1x128xf32, #tpu.memory_space<vmem>>, vector<1x1x128xf32>
    %cst_22 = arith.constant dense<0.000000e+00> : vector<128xf32>
    %49 = vector.multi_reduction <add>, %47, %cst_22 [0] : vector<16x128xf32> to vector<128xf32>
    %50 = vector.shape_cast %49 : vector<128xf32> to vector<1x128xf32>
    %51 = vector.shape_cast %50 : vector<1x128xf32> to vector<1x1x128xf32>
    %52 = arith.addf %48, %51 : vector<1x1x128xf32>
    %c0_23 = arith.constant 0 : index
    %c0_24 = arith.constant 0 : index
    %c0_25 = arith.constant 0 : index
    %53 = vector.load %arg7[%c0_23, %c0_24, %c0_25] : memref<1x1x128xf32, #tpu.memory_space<vmem>>, vector<1x1x128xf32>
    tpu.vector_store %arg7[%c0_23, %c0_24, %c0_25], %52 {strides = array<i32>} : memref<1x1x128xf32, #tpu.memory_space<vmem>>, vector<1x1x128xf32>,
    %c0_26 = arith.constant 0 : index
    %c0_27 = arith.constant 0 : index
    %54 = vector.load %arg4[%c0_26, %c0_27] : memref<16x128xf32, #tpu.memory_space<vmem>>, vector<16x128xf32>
    %cst_28 = arith.constant 0.000000e+00 : f32
    %55 = vector.broadcast %cst_28 : f32 to vector<16x128xf32>
    %56 = arith.maximumf %54, %55 : vector<16x128xf32>
    %57 = arith.mulf %54, %15 : vector<16x128xf32>
    %58 = arith.subf %56, %57 : vector<16x128xf32>
    %59 = math.absf %54 : vector<16x128xf32>
    %cst_29 = arith.constant 0.000000e+00 : f32
    %60 = vector.broadcast %cst_29 : f32 to vector<16x128xf32>
    %61 = arith.subf %60, %59 : vector<16x128xf32>
    %62 = math.exp %61 : vector<16x128xf32>
    %63 = math.log1p %62 : vector<16x128xf32>
    %64 = arith.addf %58, %63 : vector<16x128xf32>
    %cst_30 = arith.constant 0.000000e+00 : f32
    %65 = vector.broadcast %cst_30 : f32 to vector<16x128xf32>
    %66 = arith.select %14, %64, %65 : vector<16x128xi1>, vector<16x128xf32>
    %c0_31 = arith.constant 0 : index
    %c0_32 = arith.constant 0 : index
    %c0_33 = arith.constant 0 : index
    %67 = vector.load %arg8[%c0_31, %c0_32, %c0_33] : memref<1x1x128xf32, #tpu.memory_space<vmem>>, vector<1x1x128xf32>
    %cst_34 = arith.constant dense<0.000000e+00> : vector<128xf32>
    %68 = vector.multi_reduction <add>, %66, %cst_34 [0] : vector<16x128xf32> to vector<128xf32>
    %69 = vector.shape_cast %68 : vector<128xf32> to vector<1x128xf32>
    %70 = vector.shape_cast %69 : vector<1x128xf32> to vector<1x1x128xf32>
    %71 = arith.addf %67, %70 : vector<1x1x128xf32>
    %c0_35 = arith.constant 0 : index
    %c0_36 = arith.constant 0 : index
    %c0_37 = arith.constant 0 : index
    %72 = vector.load %arg8[%c0_35, %c0_36, %c0_37] : memref<1x1x128xf32, #tpu.memory_space<vmem>>, vector<1x1x128xf32>
    tpu.vector_store %arg8[%c0_35, %c0_36, %c0_37], %71 {strides = array<i32>} : memref<1x1x128xf32, #tpu.memory_space<vmem>>, vector<1x1x128xf32>,
    return
  }
  func.func @transform_0(%arg0: i32, %arg1: i32) -> (i32, i32) {
    %c1_i32 = arith.constant 1 : i32
    %0 = arith.muli %arg0, %c1_i32 : i32
    %1 = arith.addi %0, %arg1 : i32
    %c0_i32 = arith.constant 0 : i32
    %2 = arith.minsi %1, %c0_i32 : i32
    %c0_i32_0 = arith.constant 0 : i32
    %c0_i32_1 = arith.constant 0 : i32
    return %2, %c0_i32_0 : i32, i32
  }
  func.func @transform_1(%arg0: i32, %arg1: i32) -> (i32, i32) {
    %c1_i32 = arith.constant 1 : i32
    %0 = arith.muli %arg0, %c1_i32 : i32
    %1 = arith.addi %0, %arg1 : i32
    %c0_i32 = arith.constant 0 : i32
    %2 = arith.minsi %1, %c0_i32 : i32
    %c0_i32_0 = arith.constant 0 : i32
    %c0_i32_1 = arith.constant 0 : i32
    return %2, %c0_i32_0 : i32, i32
  }
  func.func @transform_2(%arg0: i32, %arg1: i32) -> (i32, i32) {
    %c1_i32 = arith.constant 1 : i32
    %0 = arith.muli %arg0, %c1_i32 : i32
    %1 = arith.addi %0, %arg1 : i32
    %c0_i32 = arith.constant 0 : i32
    %2 = arith.minsi %1, %c0_i32 : i32
    %c0_i32_0 = arith.constant 0 : i32
    %c0_i32_1 = arith.constant 0 : i32
    return %2, %c0_i32_0 : i32, i32
  }
  func.func @transform_3(%arg0: i32, %arg1: i32) -> (i32, i32) {
    %c1_i32 = arith.constant 1 : i32
    %0 = arith.muli %arg0, %c1_i32 : i32
    %1 = arith.addi %0, %arg1 : i32
    %c0_i32 = arith.constant 0 : i32
    %2 = arith.minsi %1, %c0_i32 : i32
    %c0_i32_0 = arith.constant 0 : i32
    %c0_i32_1 = arith.constant 0 : i32
    return %2, %c0_i32_0 : i32, i32
  }
  func.func @transform_4(%arg0: i32, %arg1: i32) -> (i32, i32, i32) {
    %c0_i32 = arith.constant 0 : i32
    %c0_i32_0 = arith.constant 0 : i32
    %c0_i32_1 = arith.constant 0 : i32
    return %arg0, %c0_i32, %c0_i32_0 : i32, i32, i32
  }
  func.func @transform_5(%arg0: i32, %arg1: i32) -> (i32, i32, i32) {
    %c0_i32 = arith.constant 0 : i32
    %c0_i32_0 = arith.constant 0 : i32
    %c0_i32_1 = arith.constant 0 : i32
    return %arg0, %c0_i32, %c0_i32_0 : i32, i32, i32
  }
  func.func @transform_6(%arg0: i32, %arg1: i32) -> (i32, i32, i32) {
    %c0_i32 = arith.constant 0 : i32
    %c0_i32_0 = arith.constant 0 : i32
    %c0_i32_1 = arith.constant 0 : i32
    return %arg0, %c0_i32, %c0_i32_0 : i32, i32, i32
  }
}

</mosaic_0001>

<llo_original>
// kernel: tpu_custom_call.1
$region0: #{tpu_custom_call.1}
  #allocation0 [shape = 'u32[]', space=smem, size = 0x4, offset = 0x4, fixed_abs, tag = 'smem constant byte address 0x4 - core index']
  #allocation1 [shape = 'u32[144,128]{1,0:T(1,128)}', space=vmem, size = 0x12000, scoped, tag = 'internal scratch']
  %s0 = inlined_call_operand.hbm [shape: f32[16,128], index: 0, kind: input, shape index: {}]
  %s1 = inlined_call_operand.hbm [shape: f32[16,128], index: 1, kind: input, shape index: {}]
  %s2 = inlined_call_operand.hbm [shape: f32[16,128], index: 2, kind: input, shape index: {}]
  %s3 = inlined_call_operand.hbm [shape: f32[16,128], index: 3, kind: input, shape index: {}]
  %s4 = inlined_call_operand.hbm [shape: f32[2,1,128], index: 4, kind: output, shape index: {0}]
  %s5 = inlined_call_operand.hbm [shape: f32[2,1,128], index: 5, kind: output, shape index: {1}]
  %s6 = inlined_call_operand.hbm [shape: f32[2,1,128], index: 6, kind: output, shape index: {2}]
  %7 = xla_tuple %s4, %s5, %s6
  %s8 = sld [smem:[#allocation0]]
  $region85: #{tpu_custom_call.1} parent=0
    _
  %s10 = ssub.s32 1, %s8
  %s11 = scalar_select 0, %s10, %s8
  $region1: #{tpu_custom_call.1} parent=0
    #allocation2 [shape = 'u8[16384]{0}', space=vmem, size = 0x4000, scoped, tag = 'input window, operand 0']
    #allocation3 [shape = 's32[2]{0}', space=sflag, size = 0x8, scoped, tag = 'scoped memory for tpu_custom_call.1']
    #allocation4 [shape = 's32[2]{0}', space=sflag, size = 0x8, scoped, tag = 'scoped memory for tpu_custom_call.1']
    #allocation5 [shape = 'u8[16384]{0}', space=vmem, size = 0x4000, scoped, tag = 'input window, operand 1']
    #allocation6 [shape = 's32[2]{0}', space=sflag, size = 0x8, scoped, tag = 'scoped memory for tpu_custom_call.1']
    #allocation7 [shape = 'u8[16384]{0}', space=vmem, size = 0x4000, scoped, tag = 'input window, operand 2']
    #allocation8 [shape = 'u8[16384]{0}', space=vmem, size = 0x4000, scoped, tag = 'input window, operand 3']
    #allocation9 [shape = 's32[2]{0}', space=sflag, size = 0x8, scoped, tag = 'scoped memory for tpu_custom_call.1']
    #allocation10 [shape = 'u8[1024]{0}', space=vmem, size = 0x400, scoped, tag = 'output window, operand 0']
    #allocation11 [shape = 'u8[1024]{0}', space=vmem, size = 0x400, scoped, tag = 'output window, operand 1']
    #allocation12 [shape = 's32[2]{0}', space=sflag, size = 0x8, scoped, tag = 'scoped memory for tpu_custom_call.1']
    #allocation13 [shape = 'u8[1024]{0}', space=vmem, size = 0x400, scoped, tag = 'output window, operand 2']
    %12 = vsyncpa [#allocation3], 0
    %s13 = scalar_lea.sflag [#allocation3], 1
    %14 = vsyncpa %s13, 0
    %15 = vsyncpa [#allocation6], 0
    %s16 = scalar_lea.sflag [#allocation6], 1
    %17 = vsyncpa %s16, 0
    %18 = vsyncpa [#allocation9], 0
    %s19 = scalar_lea.sflag [#allocation9], 1
    %20 = vsyncpa %s19, 0
    %21 = vsyncpa [#allocation4], 0
    %s22 = scalar_lea.sflag [#allocation4], 1
    %23 = vsyncpa %s22, 0
    %24 = vsyncpa [#allocation12], 0
    %s25 = scalar_lea.sflag [#allocation12], 1
    %26 = vsyncpa %s25, 0
    loop: start=0, step=1, limit=4
    $region2: #{tpu_custom_call.1} parent=1 // loop_pre_header
      _
    $region3: #{tpu_custom_call.1} parent=1 // loop_header
      %s28 = sphi 0, %s32
      %p29 = scmp.ge.s32.totalorder %s28, 4
      %s35 = sphi 0, %s47
      %s36 = sphi 0, %s43
      %s37 = sphi 0, %s35
      %s38 = sphi 0, %s36
      %s39 = sphi 0, %s37
      %s40 = sphi 0, %s38
      %s56 = sphi 0, %s58
      %s59 = sphi 0, %s56
      %s60 = sphi 0, %s59
      %s76 = sphi 0, %s60
      %s88 = sphi 0, %s90
      %s91 = sphi 0, %s88
      %s92 = sphi 0, %s91
      %s108 = sphi 0, %s92
      %s120 = sphi 0, %s122
      %s123 = sphi 0, %s120
      %s124 = sphi 0, %s123
      %s140 = sphi 0, %s124
      %s152 = sphi 0, %s154
      %s155 = sphi 0, %s152
      %s156 = sphi 0, %s155
      %s172 = sphi 0, %s156
      %s178 = sphi 0, %s180
      %s181 = sphi 0, %s178
      %s182 = sphi 0, %s181
      %s198 = sphi 0, %s182
      %s204 = sphi 0, %s206
      %s207 = sphi 0, %s204
      %s208 = sphi 0, %s207
      %s224 = sphi 0, %s208
      %s230 = sphi 0, %s232
      %s233 = sphi 0, %s230
      %s234 = sphi 0, %s233
      %s250 = sphi 0, %s234
    $region4: #{tpu_custom_call.1} parent=1 // loop_header_branch
      %31 = sbr.rel (%p29) target = $region8
    $region5: #{tpu_custom_call.1} parent=1 // loop_body
      %s33 = ssub.s32 %s28, 1
      %s34 = ssub.s32 %s28, 2
      %s41 = sadd.s32 1, %s36
      %p42 = scmp.ge.s32.totalorder %s41, 1
      %s43 = scalar_select %p42, 0, %s41
      %s44 = sadd.s32 1, %s35
      %s45 = scalar_select %p42, %s44, %s35
      %p46 = scmp.ge.s32.totalorder %s45, 2
      %s47 = scalar_select %p46, 0, %s45
      %s48 = sadd.s32 %s35, %s36
      %p49 = scmp.lt.s32.totalorder %s48, 0
      %s50 = scalar_select %p49, %s48, 0
      %s51 = sadd.s32 %s47, %s43
      %p52 = scmp.lt.s32.totalorder %s51, 0
      %s53 = scalar_select %p52, %s51, 0
      %s54 = ssub.s32 %s50, %s53
      %p55 = scmp.eq.s32.totalorder %s54, 0
      %s57 = sadd.s32 %s56, 1
      %s58 = scalar_select %p55, %s56, %s57
      %p61 = pneg %p55
      %p62 = scmp.eq.s32.totalorder %s28, 1
      %p63 = por %p61, %p62
      %p64 = scmp.ne.s32.totalorder %s56, %s59
      %p65 = scmp.eq.s32.totalorder %s28, 0
      %p66 = por %p64, %p65
      %p67 = scmp.ne.s32.totalorder %s56, %s59
      %p68 = scmp.eq.s32.totalorder %s33, 1
      %p69 = por %p67, %p68
      %p70 = scmp.ne.s32.totalorder %s59, %s60
      %p71 = scmp.eq.s32.totalorder %s33, 0
      %p72 = por %p70, %p71
      %p73 = scmp.ne.s32.totalorder %s59, %s60
      %p74 = scmp.eq.s32.totalorder %s34, 1
      %p75 = por %p73, %p74
      %p77 = scmp.ne.s32.totalorder %s60, %s76
      %p78 = scmp.eq.s32.totalorder %s34, 0
      %p79 = por %p77, %p78
      %s80 = sadd.s32 %s35, %s36
      %p81 = scmp.lt.s32.totalorder %s80, 0
      %s82 = scalar_select %p81, %s80, 0
      %s83 = sadd.s32 %s47, %s43
      %p84 = scmp.lt.s32.totalorder %s83, 0
      %s85 = scalar_select %p84, %s83, 0
      %s86 = ssub.s32 %s82, %s85
      %p87 = scmp.eq.s32.totalorder %s86, 0
      %s89 = sadd.s32 %s88, 1
      %s90 = scalar_select %p87, %s88, %s89
      %p93 = pneg %p87
      %p94 = scmp.eq.s32.totalorder %s28, 1
      %p95 = por %p93, %p94
      %p96 = scmp.ne.s32.totalorder %s88, %s91
      %p97 = scmp.eq.s32.totalorder %s28, 0
      %p98 = por %p96, %p97
      %p99 = scmp.ne.s32.totalorder %s88, %s91
      %p100 = scmp.eq.s32.totalorder %s33, 1
      %p101 = por %p99, %p100
      %p102 = scmp.ne.s32.totalorder %s91, %s92
      %p103 = scmp.eq.s32.totalorder %s33, 0
      %p104 = por %p102, %p103
      %p105 = scmp.ne.s32.totalorder %s91, %s92
      %p106 = scmp.eq.s32.totalorder %s34, 1
      %p107 = por %p105, %p106
      %p109 = scmp.ne.s32.totalorder %s92, %s108
      %p110 = scmp.eq.s32.totalorder %s34, 0
      %p111 = por %p109, %p110
      %s112 = sadd.s32 %s35, %s36
      %p113 = scmp.lt.s32.totalorder %s112, 0
      %s114 = scalar_select %p113, %s112, 0
      %s115 = sadd.s32 %s47, %s43
      %p116 = scmp.lt.s32.totalorder %s115, 0
      %s117 = scalar_select %p116, %s115, 0
      %s118 = ssub.s32 %s114, %s117
      %p119 = scmp.eq.s32.totalorder %s118, 0
      %s121 = sadd.s32 %s120, 1
      %s122 = scalar_select %p119, %s120, %s121
      %p125 = pneg %p119
      %p126 = scmp.eq.s32.totalorder %s28, 1
      %p127 = por %p125, %p126
      %p128 = scmp.ne.s32.totalorder %s120, %s123
      %p129 = scmp.eq.s32.totalorder %s28, 0
      %p130 = por %p128, %p129
      %p131 = scmp.ne.s32.totalorder %s120, %s123
      %p132 = scmp.eq.s32.totalorder %s33, 1
      %p133 = por %p131, %p132
      %p134 = scmp.ne.s32.totalorder %s123, %s124
      %p135 = scmp.eq.s32.totalorder %s33, 0
      %p136 = por %p134, %p135
      %p137 = scmp.ne.s32.totalorder %s123, %s124
      %p138 = scmp.eq.s32.totalorder %s34, 1
      %p139 = por %p137, %p138
      %p141 = scmp.ne.s32.totalorder %s124, %s140
      %p142 = scmp.eq.s32.totalorder %s34, 0
      %p143 = por %p141, %p142
      %s144 = sadd.s32 %s35, %s36
      %p145 = scmp.lt.s32.totalorder %s144, 0
      %s146 = scalar_select %p145, %s144, 0
      %s147 = sadd.s32 %s47, %s43
      %p148 = scmp.lt.s32.totalorder %s147, 0
      %s149 = scalar_select %p148, %s147, 0
      %s150 = ssub.s32 %s146, %s149
      %p151 = scmp.eq.s32.totalorder %s150, 0
      %s153 = sadd.s32 %s152, 1
      %s154 = scalar_select %p151, %s152, %s153
      %p157 = pneg %p151
      %p158 = scmp.eq.s32.totalorder %s28, 1
      %p159 = por %p157, %p158
      %p160 = scmp.ne.s32.totalorder %s152, %s155
      %p161 = scmp.eq.s32.totalorder %s28, 0
      %p162 = por %p160, %p161
      %p163 = scmp.ne.s32.totalorder %s152, %s155
      %p164 = scmp.eq.s32.totalorder %s33, 1
      %p165 = por %p163, %p164
      %p166 = scmp.ne.s32.totalorder %s155, %s156
      %p167 = scmp.eq.s32.totalorder %s33, 0
      %p168 = por %p166, %p167
      %p169 = scmp.ne.s32.totalorder %s155, %s156
      %p170 = scmp.eq.s32.totalorder %s34, 1
      %p171 = por %p169, %p170
      %p173 = scmp.ne.s32.totalorder %s156, %s172
      %p174 = scmp.eq.s32.totalorder %s34, 0
      %p175 = por %p173, %p174
      %s176 = ssub.s32 %s35, %s47
      %p177 = scmp.eq.s32.totalorder %s176, 0
      %s179 = sadd.s32 %s178, 1
      %s180 = scalar_select %p177, %s178, %s179
      %p183 = pneg %p177
      %p184 = scmp.eq.s32.totalorder %s28, 1
      %p185 = por %p183, %p184
      %p186 = scmp.ne.s32.totalorder %s178, %s181
      %p187 = scmp.eq.s32.totalorder %s28, 0
      %p188 = por %p186, %p187
      %p189 = scmp.ne.s32.totalorder %s178, %s181
      %p190 = scmp.eq.s32.totalorder %s33, 1
      %p191 = por %p189, %p190
      %p192 = scmp.ne.s32.totalorder %s181, %s182
      %p193 = scmp.eq.s32.totalorder %s33, 0
      %p194 = por %p192, %p193
      %p195 = scmp.ne.s32.totalorder %s181, %s182
      %p196 = scmp.eq.s32.totalorder %s34, 1
      %p197 = por %p195, %p196
      %p199 = scmp.ne.s32.totalorder %s182, %s198
      %p200 = scmp.eq.s32.totalorder %s34, 0
      %p201 = por %p199, %p200
      %s202 = ssub.s32 %s35, %s47
      %p203 = scmp.eq.s32.totalorder %s202, 0
      %s205 = sadd.s32 %s204, 1
      %s206 = scalar_select %p203, %s204, %s205
      %p209 = pneg %p203
      %p210 = scmp.eq.s32.totalorder %s28, 1
      %p211 = por %p209, %p210
      %p212 = scmp.ne.s32.totalorder %s204, %s207
      %p213 = scmp.eq.s32.totalorder %s28, 0
      %p214 = por %p212, %p213
      %p215 = scmp.ne.s32.totalorder %s204, %s207
      %p216 = scmp.eq.s32.totalorder %s33, 1
      %p217 = por %p215, %p216
      %p218 = scmp.ne.s32.totalorder %s207, %s208
      %p219 = scmp.eq.s32.totalorder %s33, 0
      %p220 = por %p218, %p219
      %p221 = scmp.ne.s32.totalorder %s207, %s208
      %p222 = scmp.eq.s32.totalorder %s34, 1
      %p223 = por %p221, %p222
      %p225 = scmp.ne.s32.totalorder %s208, %s224
      %p226 = scmp.eq.s32.totalorder %s34, 0
      %p227 = por %p225, %p226
      %s228 = ssub.s32 %s35, %s47
      %p229 = scmp.eq.s32.totalorder %s228, 0
      %s231 = sadd.s32 %s230, 1
      %s232 = scalar_select %p229, %s230, %s231
      %p235 = pneg %p229
      %p236 = scmp.eq.s32.totalorder %s28, 1
      %p237 = por %p235, %p236
      %p238 = scmp.ne.s32.totalorder %s230, %s233
      %p239 = scmp.eq.s32.totalorder %s28, 0
      %p240 = por %p238, %p239
      %p241 = scmp.ne.s32.totalorder %s230, %s233
      %p242 = scmp.eq.s32.totalorder %s33, 1
      %p243 = por %p241, %p242
      %p244 = scmp.ne.s32.totalorder %s233, %s234
      %p245 = scmp.eq.s32.totalorder %s33, 0
      %p246 = por %p244, %p245
      %p247 = scmp.ne.s32.totalorder %s233, %s234
      %p248 = scmp.eq.s32.totalorder %s34, 1
      %p249 = por %p247, %p248
      %p251 = scmp.ne.s32.totalorder %s234, %s250
      %p252 = scmp.eq.s32.totalorder %s34, 0
      %p253 = por %p251, %p252
      %p254 = scmp.le.s32.totalorder 1, %s28
      %p255 = scmp.lt.s32.totalorder %s28, 3
      %p256 = pnand %p254, %p255
      %p257 = pneg %p256
      // Predicated region
      $region9: #{tpu_custom_call.1} parent=5 // pred_check
        _
      $region10: #{tpu_custom_call.1} parent=5 // pred_check_branch
        %259 = sbr.rel (%p256) target = $region12
      $region11: #{tpu_custom_call.1} parent=5 // pred_region
        %s260 = ssub.s32 %s28, 1
      $region12: #{tpu_custom_call.1} parent=5 // pred_fallthru
        _
      %p261 = scmp.lt.s32.totalorder %s28, 2
      // Predicated region
      $region13: #{tpu_custom_call.1} parent=5 // pred_check
        %p262 = pneg %p261
      $region14: #{tpu_custom_call.1} parent=5 // pred_check_branch
        %264 = sbr.rel (%p262) target = $region16
      $region15: #{tpu_custom_call.1} parent=5 // pred_region
        // Predicated region
        $region17: #{tpu_custom_call.1} parent=15 // pred_check
          %p265 = pneg %p66
        $region18: #{tpu_custom_call.1} parent=15 // pred_check_branch
          %267 = sbr.rel (%p265) target = $region20
        $region19: #{tpu_custom_call.1} parent=15 // pred_region
          %s268 = sand.u32 %s56, 1
          %s269 = scalar_lea.sflag [#allocation3], %s268
          %s270 = sand.u32 %s56, 1
          %s271 = smul.addr %s270, 16
          %s272 = scalar_lea.vmem [#allocation2], %s271
          %s273 = sadd.s32 %s35, %s36
          %p274 = scmp.lt.s32.totalorder %s273, 0
          %s275 = scalar_select %p274, %s273, 0
          %s276 = smul.u32 2, %s275
          %s278 = ssub.s32 256, 256
          %279 = vsyncadd %s269, %s278
          %s280 = smul.addr %s276, 128
          %s281 = scalar_lea.hbm %s0, %s280
          %s282 = sshll.u32 %s272, 4
          %s283 = int_to_ptr.vmem [resolvable:$true] %s282
          %288 = dma.hbm_to_vmem [thread:$0]  %s281, 256, %s283, %s269, 128, 128, 8
        $region20: #{tpu_custom_call.1} parent=15 // pred_fallthru
          _
        // Predicated region
        $region21: #{tpu_custom_call.1} parent=15 // pred_check
          %p289 = pneg %p98
        $region22: #{tpu_custom_call.1} parent=15 // pred_check_branch
          %291 = sbr.rel (%p289) target = $region24
        $region23: #{tpu_custom_call.1} parent=15 // pred_region
          %s292 = sand.u32 %s28, 1
          %s293 = scalar_lea.sflag [#allocation6], %s292
          %s294 = sand.u32 %s88, 1
          %s295 = smul.addr %s294, 16
          %s296 = scalar_lea.vmem [#allocation5], %s295
          %s297 = sadd.s32 %s35, %s36
          %p298 = scmp.lt.s32.totalorder %s297, 0
          %s299 = scalar_select %p298, %s297, 0
          %s300 = smul.u32 2, %s299
          %s302 = ssub.s32 256, 256
          %303 = vsyncadd %s293, %s302
          %s304 = smul.addr %s300, 128
          %s305 = scalar_lea.hbm %s1, %s304
          %s306 = sshll.u32 %s296, 4
          %s307 = int_to_ptr.vmem [resolvable:$true] %s306
          %312 = dma.hbm_to_vmem [thread:$0]  %s305, 256, %s307, %s293, 128, 128, 8
        $region24: #{tpu_custom_call.1} parent=15 // pred_fallthru
          _
        // Predicated region
        $region25: #{tpu_custom_call.1} parent=15 // pred_check
          %p313 = pneg %p130
        $region26: #{tpu_custom_call.1} parent=15 // pred_check_branch
          %315 = sbr.rel (%p313) target = $region28
        $region27: #{tpu_custom_call.1} parent=15 // pred_region
          %s316 = sand.u32 %s28, 1
          %s317 = scalar_lea.sflag [#allocation6], %s316
          %s318 = sand.u32 %s120, 1
          %s319 = smul.addr %s318, 16
          %s320 = scalar_lea.vmem [#allocation7], %s319
          %s321 = sadd.s32 %s35, %s36
          %p322 = scmp.lt.s32.totalorder %s321, 0
          %s323 = scalar_select %p322, %s321, 0
          %s324 = smul.u32 2, %s323
          %s326 = ssub.s32 256, 256
          %327 = vsyncadd %s317, %s326
          %s328 = smul.addr %s324, 128
          %s329 = scalar_lea.hbm %s2, %s328
          %s330 = sshll.u32 %s320, 4
          %s331 = int_to_ptr.vmem [resolvable:$true] %s330
          %336 = dma.hbm_to_vmem [thread:$0]  %s329, 256, %s331, %s317, 128, 128, 8
        $region28: #{tpu_custom_call.1} parent=15 // pred_fallthru
          _
        // Predicated region
        $region29: #{tpu_custom_call.1} parent=15 // pred_check
          %p337 = pneg %p162
        $region30: #{tpu_custom_call.1} parent=15 // pred_check_branch
          %339 = sbr.rel (%p337) target = $region32
        $region31: #{tpu_custom_call.1} parent=15 // pred_region
          %s340 = sand.u32 %s152, 1
          %s341 = scalar_lea.sflag [#allocation9], %s340
          %s342 = sand.u32 %s152, 1
          %s343 = smul.addr %s342, 16
          %s344 = scalar_lea.vmem [#allocation8], %s343
          %s345 = sadd.s32 %s35, %s36
          %p346 = scmp.lt.s32.totalorder %s345, 0
          %s347 = scalar_select %p346, %s345, 0
          %s348 = smul.u32 2, %s347
          %s350 = ssub.s32 256, 256
          %351 = vsyncadd %s341, %s350
          %s352 = smul.addr %s348, 128
          %s353 = scalar_lea.hbm %s3, %s352
          %s354 = sshll.u32 %s344, 4
          %s355 = int_to_ptr.vmem [resolvable:$true] %s354
          %360 = dma.hbm_to_vmem [thread:$0]  %s353, 256, %s355, %s341, 128, 128, 8
        $region32: #{tpu_custom_call.1} parent=15 // pred_fallthru
          _
      $region16: #{tpu_custom_call.1} parent=5 // pred_fallthru
        _
      %p361 = scmp.le.s32.totalorder 1, %s28
      %p362 = scmp.lt.s32.totalorder %s28, 3
      %p363 = pnand %p361, %p362
      %p364 = pneg %p363
      // Predicated region
      $region33: #{tpu_custom_call.1} parent=5 // pred_check
        _
      $region34: #{tpu_custom_call.1} parent=5 // pred_check_branch
        %366 = sbr.rel (%p363) target = $region36
      $region35: #{tpu_custom_call.1} parent=5 // pred_region
        %s367 = ssub.s32 %s28, 1
        %s368 = sand.u32 %s59, 1
        %s369 = scalar_lea.sflag [#allocation3], %s368
        %s370 = sand.u32 %s59, 1
        %s371 = smul.addr %s370, 16
        %s372 = scalar_lea.vmem [#allocation2], %s371
        // Predicated region
        $region37: #{tpu_custom_call.1} parent=35 // pred_check
          %p373 = pneg %p72
        $region38: #{tpu_custom_call.1} parent=35 // pred_check_branch
          %375 = sbr.rel (%p373) target = $region40
        $region39: #{tpu_custom_call.1} parent=35 // pred_region
          %376 = dma.done %s369, 256
        $region40: #{tpu_custom_call.1} parent=35 // pred_fallthru
          _
        %s377 = sand.u32 %s33, 1
        %s378 = scalar_lea.sflag [#allocation6], %s377
        %s379 = sand.u32 %s91, 1
        %s380 = smul.addr %s379, 16
        %s381 = scalar_lea.vmem [#allocation5], %s380
        // Predicated region
        $region41: #{tpu_custom_call.1} parent=35 // pred_check
          %p382 = pneg %p104
        $region42: #{tpu_custom_call.1} parent=35 // pred_check_branch
          %384 = sbr.rel (%p382) target = $region44
        $region43: #{tpu_custom_call.1} parent=35 // pred_region
          %385 = dma.done %s378, 256
        $region44: #{tpu_custom_call.1} parent=35 // pred_fallthru
          _
        %s386 = sand.u32 %s33, 1
        %s387 = scalar_lea.sflag [#allocation6], %s386
        %s388 = sand.u32 %s123, 1
        %s389 = smul.addr %s388, 16
        %s390 = scalar_lea.vmem [#allocation7], %s389
        // Predicated region
        $region45: #{tpu_custom_call.1} parent=35 // pred_check
          %p391 = pneg %p136
        $region46: #{tpu_custom_call.1} parent=35 // pred_check_branch
          %393 = sbr.rel (%p391) target = $region48
        $region47: #{tpu_custom_call.1} parent=35 // pred_region
          %394 = dma.done %s387, 256
        $region48: #{tpu_custom_call.1} parent=35 // pred_fallthru
          _
        %s395 = sand.u32 %s155, 1
        %s396 = scalar_lea.sflag [#allocation9], %s395
        %s397 = sand.u32 %s155, 1
        %s398 = smul.addr %s397, 16
        %s399 = scalar_lea.vmem [#allocation8], %s398
        // Predicated region
        $region49: #{tpu_custom_call.1} parent=35 // pred_check
          %p400 = pneg %p168
        $region50: #{tpu_custom_call.1} parent=35 // pred_check_branch
          %402 = sbr.rel (%p400) target = $region52
        $region51: #{tpu_custom_call.1} parent=35 // pred_region
          %403 = dma.done %s396, 256
        $region52: #{tpu_custom_call.1} parent=35 // pred_fallthru
          _
        %s404 = sand.u32 %s59, 1
        %s405 = scalar_lea.sflag [#allocation3], %s404
        %s406 = sand.u32 %s59, 1
        %s407 = smul.addr %s406, 16
        %s408 = scalar_lea.vmem [#allocation2], %s407
        %p409 = pneg %p72
        %p410 = pneg %p69
        %s411 = sand.u32 %s33, 1
        %s412 = scalar_lea.sflag [#allocation6], %s411
        %s413 = sand.u32 %s91, 1
        %s414 = smul.addr %s413, 16
        %s415 = scalar_lea.vmem [#allocation5], %s414
        %p416 = pneg %p104
        %p417 = pneg %p101
        %s418 = sand.u32 %s33, 1
        %s419 = scalar_lea.sflag [#allocation6], %s418
        %s420 = sand.u32 %s123, 1
        %s421 = smul.addr %s420, 16
        %s422 = scalar_lea.vmem [#allocation7], %s421
        %p423 = pneg %p136
        %p424 = pneg %p133
        %s425 = sand.u32 %s155, 1
        %s426 = scalar_lea.sflag [#allocation9], %s425
        %s427 = sand.u32 %s155, 1
        %s428 = smul.addr %s427, 16
        %s429 = scalar_lea.vmem [#allocation8], %s428
        %p430 = pneg %p168
        %p431 = pneg %p165
        %p432 = pneg %p194
        %p433 = pneg %p191
        %s434 = sand.u32 %s181, 1
        %s435 = scalar_lea.sflag [#allocation4], %s434
        %s436 = sand.u32 %s181, 1
        %s437 = scalar_lea.vmem [#allocation10], %s436
        %p438 = pneg %p220
        %p439 = pneg %p217
        %s440 = sand.u32 %s33, 1
        %s441 = scalar_lea.sflag [#allocation12], %s440
        %s442 = sand.u32 %s207, 1
        %s443 = scalar_lea.vmem [#allocation11], %s442
        %p444 = pneg %p246
        %p445 = pneg %p243
        %s446 = sand.u32 %s33, 1
        %s447 = scalar_lea.sflag [#allocation12], %s446
        %s448 = sand.u32 %s233, 1
        %s449 = scalar_lea.vmem [#allocation13], %s448
        %s450 = sadd.s32 %s37, %s38
        %p451 = scmp.lt.s32.totalorder %s450, 0
        %s452 = scalar_select %p451, %s450, 0
        %s453 = smul.u32 2, %s452
        %s454 = sadd.s32 %s37, %s38
        %p455 = scmp.lt.s32.totalorder %s454, 0
        %s456 = scalar_select %p455, %s454, 0
        %s457 = smul.u32 2, %s456
        %s458 = sadd.s32 %s37, %s38
        %p459 = scmp.lt.s32.totalorder %s458, 0
        %s460 = scalar_select %p459, %s458, 0
        %s461 = smul.u32 2, %s460
        %s462 = sadd.s32 %s37, %s38
        %p463 = scmp.lt.s32.totalorder %s462, 0
        %s464 = scalar_select %p463, %s462, 0
        %s465 = smul.u32 2, %s464
        %p466 = scmp.eq.s32.totalorder %s38, 0
        // Predicated region
        $region53: #{tpu_custom_call.1} parent=35 // pred_check
          %p467 = pneg %p466
        $region54: #{tpu_custom_call.1} parent=35 // pred_check_branch
          %469 = sbr.rel (%p467) target = $region56
        $region55: #{tpu_custom_call.1} parent=35 // pred_region
          %470 = vst [vmem:[%s437] sm:$0x1] 0.0
          %471 = vst [vmem:[%s443] sm:$0x1] 0.0
          %472 = vst [vmem:[%s449] sm:$0x1] 0.0
        $region56: #{tpu_custom_call.1} parent=35 // pred_fallthru
          _
        %s473 = sadd.s32 %s37, %s38
        %s474 = smul.u32 %s473, 2048
        %v475 = vlaneseq
        %v476 = vshrl.u32 %v475, 7
        %v477 = vadd.s32 %v476, 8
        %v478 = vlaneseq
        %v479 = vand.u32 %v478, 127
        %v480 = vmul.u32 %v476, 128
        %v481 = vmul.u32 %v477, 128
        %v482 = vstv %s474
        %v483 = vadd.s32 %v482, %v480
        %v484 = vadd.s32 %v482, %v481
        %v485 = vadd.s32 %v483, %v479
        %v486 = vadd.s32 %v484, %v479
        %vm487 = vcmp.lt.s32.totalorder %v485, 2048
        %vm488 = vcmp.lt.s32.totalorder %v486, 2048
        %v489 = vld [vmem:[%s399] sm:$0xff]
        %v490 = vld [vmem:[%s399 + $0x8] sm:$0xff]
        %v491 = vld [vmem:[%s372] sm:$0xff]
        %v492 = vld [vmem:[%s372 + $0x8] sm:$0xff]
        %v493 = vmax.f32 %v491, 0.0
        %v494 = vmax.f32 %v492, 0.0
        %v495 = vmul.f32 %v491, %v489
        %v496 = vmul.f32 %v492, %v490
        %v497 = vsub.f32 %v493, %v495
        %v498 = vsub.f32 %v494, %v496
        %v499 = vand.u32 2147483647, %v491
        %v500 = vand.u32 2147483647, %v492
        %v501 = vsub.f32 0.0, %v499
        %v502 = vsub.f32 0.0, %v500
        %v503 = vmul.f32 %v501, 1.442695
        %v504 = vpow.pop %v503
        %v505 = vmul.f32 %v502, 1.442695
        %v506 = vpow.pop %v505
        %v507 = vadd.f32 %v504, 1.0
        %v508 = vlog2.pop %v507
        %v509 = vmul.f32 %v508, 0.6931472
        %v510 = vmul.f32 -0.5, %v504
        %v511 = vadd.f32 %v510, 1.0
        %v512 = vmul.f32 %v511, %v504
        %v513 = vand.u32 2147483647, %v504
        %vm514 = vcmp.lt.f32.partialorder %v513, 0.0004427343
        %v515 = vsel %vm514, %v512, %v509
        %v516 = vadd.f32 %v506, 1.0
        %v517 = vlog2.pop %v516
        %v518 = vmul.f32 %v517, 0.6931472
        %v519 = vmul.f32 -0.5, %v506
        %v520 = vadd.f32 %v519, 1.0
        %v521 = vmul.f32 %v520, %v506
        %v522 = vand.u32 2147483647, %v506
        %vm523 = vcmp.lt.f32.partialorder %v522, 0.0004427343
        %v524 = vsel %vm523, %v521, %v518
        %v525 = vadd.f32 %v497, %v515
        %v526 = vadd.f32 %v498, %v524
        %v527 = vsel %vm487, %v525, 0.0
        %v528 = vsel %vm488, %v526, 0.0
        %v529 = vld [vmem:[%s437] sm:$0x1]
        %v530 = vadd.f32 %v527, %v528
        %v531 = vrot.slane %v530, 4
        %v532 = vadd.f32 %v530, %v531
        %v533 = vrot.slane %v532, 2
        %v534 = vadd.f32 %v532, %v533
        %v535 = vrot.slane %v534, 1
        %v536 = vadd.f32 %v534, %v535
        %v537 = vadd.f32 %v529, %v536
        %538 = vst [vmem:[%s437] sm:$0x1] %v537
        %v539 = vld [vmem:[%s381] sm:$0xff]
        %v540 = vld [vmem:[%s381 + $0x8] sm:$0xff]
        %v541 = vmax.f32 %v539, 0.0
        %v542 = vmax.f32 %v540, 0.0
        %v543 = vmul.f32 %v539, %v489
        %v544 = vmul.f32 %v540, %v490
        %v545 = vsub.f32 %v541, %v543
        %v546 = vsub.f32 %v542, %v544
        %v547 = vand.u32 2147483647, %v539
        %v548 = vand.u32 2147483647, %v540
        %v549 = vsub.f32 0.0, %v547
        %v550 = vsub.f32 0.0, %v548
        %v551 = vmul.f32 %v549, 1.442695
        %v552 = vpow.pop %v551
        %v553 = vmul.f32 %v550, 1.442695
        %v554 = vpow.pop %v553
        %v555 = vadd.f32 %v552, 1.0
        %v556 = vlog2.pop %v555
        %v557 = vmul.f32 %v556, 0.6931472
        %v558 = vmul.f32 -0.5, %v552
        %v559 = vadd.f32 %v558, 1.0
        %v560 = vmul.f32 %v559, %v552
        %v561 = vand.u32 2147483647, %v552
        %vm562 = vcmp.lt.f32.partialorder %v561, 0.0004427343
        %v563 = vsel %vm562, %v560, %v557
        %v564 = vadd.f32 %v554, 1.0
        %v565 = vlog2.pop %v564
        %v566 = vmul.f32 %v565, 0.6931472
        %v567 = vmul.f32 -0.5, %v554
        %v568 = vadd.f32 %v567, 1.0
        %v569 = vmul.f32 %v568, %v554
        %v570 = vand.u32 2147483647, %v554
        %vm571 = vcmp.lt.f32.partialorder %v570, 0.0004427343
        %v572 = vsel %vm571, %v569, %v566
        %v573 = vadd.f32 %v545, %v563
        %v574 = vadd.f32 %v546, %v572
        %v575 = vsel %vm487, %v573, 0.0
        %v576 = vsel %vm488, %v574, 0.0
        %v577 = vld [vmem:[%s443] sm:$0x1]
        %v578 = vadd.f32 %v575, %v576
        %v579 = vrot.slane %v578, 4
        %v580 = vadd.f32 %v578, %v579
        %v581 = vrot.slane %v580, 2
        %v582 = vadd.f32 %v580, %v581
        %v583 = vrot.slane %v582, 1
        %v584 = vadd.f32 %v582, %v583
        %v585 = vadd.f32 %v577, %v584
        %586 = vst [vmem:[%s443] sm:$0x1] %v585
        %v587 = vld [vmem:[%s390] sm:$0xff]
        %v588 = vld [vmem:[%s390 + $0x8] sm:$0xff]
        %v589 = vmax.f32 %v587, 0.0
        %v590 = vmax.f32 %v588, 0.0
        %v591 = vmul.f32 %v587, %v489
        %v592 = vmul.f32 %v588, %v490
        %v593 = vsub.f32 %v589, %v591
        %v594 = vsub.f32 %v590, %v592
        %v595 = vand.u32 2147483647, %v587
        %v596 = vand.u32 2147483647, %v588
        %v597 = vsub.f32 0.0, %v595
        %v598 = vsub.f32 0.0, %v596
        %v599 = vmul.f32 %v597, 1.442695
        %v600 = vpow.pop %v599
        %v601 = vmul.f32 %v598, 1.442695
        %v602 = vpow.pop %v601
        %v603 = vadd.f32 %v600, 1.0
        %v604 = vlog2.pop %v603
        %v605 = vmul.f32 %v604, 0.6931472
        %v606 = vmul.f32 -0.5, %v600
        %v607 = vadd.f32 %v606, 1.0
        %v608 = vmul.f32 %v607, %v600
        %v609 = vand.u32 2147483647, %v600
        %vm610 = vcmp.lt.f32.partialorder %v609, 0.0004427343
        %v611 = vsel %vm610, %v608, %v605
        %v612 = vadd.f32 %v602, 1.0
        %v613 = vlog2.pop %v612
        %v614 = vmul.f32 %v613, 0.6931472
        %v615 = vmul.f32 -0.5, %v602
        %v616 = vadd.f32 %v615, 1.0
        %v617 = vmul.f32 %v616, %v602
        %v618 = vand.u32 2147483647, %v602
        %vm619 = vcmp.lt.f32.partialorder %v618, 0.0004427343
        %v620 = vsel %vm619, %v617, %v614
        %v621 = vadd.f32 %v593, %v611
        %v622 = vadd.f32 %v594, %v620
        %v623 = vsel %vm487, %v621, 0.0
        %v624 = vsel %vm488, %v622, 0.0
        %v625 = vld [vmem:[%s449] sm:$0x1]
        %v626 = vadd.f32 %v623, %v624
        %v627 = vrot.slane %v626, 4
        %v628 = vadd.f32 %v626, %v627
        %v629 = vrot.slane %v628, 2
        %v630 = vadd.f32 %v628, %v629
        %v631 = vrot.slane %v630, 1
        %v632 = vadd.f32 %v630, %v631
        %v633 = vadd.f32 %v625, %v632
        %634 = vst [vmem:[%s449] sm:$0x1] %v633
        %s635 = sand.u32 %s181, 1
        %s636 = scalar_lea.sflag [#allocation4], %s635
        %s637 = sand.u32 %s181, 1
        %s638 = scalar_lea.vmem [#allocation10], %s637
        %s639 = sand.u32 %s33, 1
        %s640 = scalar_lea.sflag [#allocation12], %s639
        %s641 = sand.u32 %s207, 1
        %s642 = scalar_lea.vmem [#allocation11], %s641
        %s643 = sand.u32 %s33, 1
        %s644 = scalar_lea.sflag [#allocation12], %s643
        %s645 = sand.u32 %s233, 1
        %s646 = scalar_lea.vmem [#allocation13], %s645
        // Predicated region
        $region57: #{tpu_custom_call.1} parent=35 // pred_check
          %p647 = pneg %p191
        $region58: #{tpu_custom_call.1} parent=35 // pred_check_branch
          %649 = sbr.rel (%p647) target = $region60
        $region59: #{tpu_custom_call.1} parent=35 // pred_region
          %s651 = ssub.s32 16, 16
          %652 = vsyncadd %s636, %s651
          %s653 = smul.addr %s37, 16
          %s654 = scalar_lea.hbm %s4, %s653
          %s656 = sshll.u32 %s638, 4
          %s657 = int_to_ptr.vmem [resolvable:$true] %s656
          %659 = dma.vmem_to_hbm [thread:$0]  %s657, 16, %s654, %s636
        $region60: #{tpu_custom_call.1} parent=35 // pred_fallthru
          _
        // Predicated region
        $region61: #{tpu_custom_call.1} parent=35 // pred_check
          %p660 = pneg %p217
        $region62: #{tpu_custom_call.1} parent=35 // pred_check_branch
          %662 = sbr.rel (%p660) target = $region64
        $region63: #{tpu_custom_call.1} parent=35 // pred_region
          %s664 = ssub.s32 16, 16
          %665 = vsyncadd %s640, %s664
          %s666 = smul.addr %s37, 16
          %s667 = scalar_lea.hbm %s5, %s666
          %s669 = sshll.u32 %s642, 4
          %s670 = int_to_ptr.vmem [resolvable:$true] %s669
          %672 = dma.vmem_to_hbm [thread:$0]  %s670, 16, %s667, %s640
        $region64: #{tpu_custom_call.1} parent=35 // pred_fallthru
          _
        // Predicated region
        $region65: #{tpu_custom_call.1} parent=35 // pred_check
          %p673 = pneg %p243
        $region66: #{tpu_custom_call.1} parent=35 // pred_check_branch
          %675 = sbr.rel (%p673) target = $region68
        $region67: #{tpu_custom_call.1} parent=35 // pred_region
          %s677 = ssub.s32 16, 16
          %678 = vsyncadd %s644, %s677
          %s679 = smul.addr %s37, 16
          %s680 = scalar_lea.hbm %s6, %s679
          %s682 = sshll.u32 %s646, 4
          %s683 = int_to_ptr.vmem [resolvable:$true] %s682
          %685 = dma.vmem_to_hbm [thread:$0]  %s683, 16, %s680, %s644
        $region68: #{tpu_custom_call.1} parent=35 // pred_fallthru
          _
      $region36: #{tpu_custom_call.1} parent=5 // pred_fallthru
        _
      %p686 = scmp.le.s32.totalorder 2, %s28
      // Predicated region
      $region69: #{tpu_custom_call.1} parent=5 // pred_check
        %p687 = pneg %p686
      $region70: #{tpu_custom_call.1} parent=5 // pred_check_branch
        %689 = sbr.rel (%p687) target = $region72
      $region71: #{tpu_custom_call.1} parent=5 // pred_region
        %s690 = ssub.s32 %s28, 2
        // Predicated region
        $region73: #{tpu_custom_call.1} parent=71 // pred_check
          %p691 = pneg %p197
        $region74: #{tpu_custom_call.1} parent=71 // pred_check_branch
          %693 = sbr.rel (%p691) target = $region76
        $region75: #{tpu_custom_call.1} parent=71 // pred_region
          %s694 = sand.u32 %s182, 1
          %s695 = scalar_lea.sflag [#allocation4], %s694
          %s696 = sand.u32 %s182, 1
          %s697 = scalar_lea.vmem [#allocation10], %s696
          %698 = dma.done %s695, 16
        $region76: #{tpu_custom_call.1} parent=71 // pred_fallthru
          _
        // Predicated region
        $region77: #{tpu_custom_call.1} parent=71 // pred_check
          %p699 = pneg %p223
        $region78: #{tpu_custom_call.1} parent=71 // pred_check_branch
          %701 = sbr.rel (%p699) target = $region80
        $region79: #{tpu_custom_call.1} parent=71 // pred_region
          %s702 = sand.u32 %s34, 1
          %s703 = scalar_lea.sflag [#allocation12], %s702
          %s704 = sand.u32 %s208, 1
          %s705 = scalar_lea.vmem [#allocation11], %s704
          %706 = dma.done %s703, 16
        $region80: #{tpu_custom_call.1} parent=71 // pred_fallthru
          _
        // Predicated region
        $region81: #{tpu_custom_call.1} parent=71 // pred_check
          %p707 = pneg %p249
        $region82: #{tpu_custom_call.1} parent=71 // pred_check_branch
          %709 = sbr.rel (%p707) target = $region84
        $region83: #{tpu_custom_call.1} parent=71 // pred_region
          %s710 = sand.u32 %s34, 1
          %s711 = scalar_lea.sflag [#allocation12], %s710
          %s712 = sand.u32 %s234, 1
          %s713 = scalar_lea.vmem [#allocation13], %s712
          %714 = dma.done %s711, 16
        $region84: #{tpu_custom_call.1} parent=71 // pred_fallthru
          _
      $region72: #{tpu_custom_call.1} parent=5 // pred_fallthru
        _
    $region6: #{tpu_custom_call.1} parent=1 // loop_footer
      %s32 = sadd.s32 1, %s28
    $region7: #{tpu_custom_call.1} parent=1 // loop_footer_branch
      %27 = sbr.rel target = $region3
    $region8: #{tpu_custom_call.1} parent=1 // loop_exit
      _
    %715 = vsyncpa [#allocation3], 1
    %s716 = scalar_lea.sflag [#allocation3], 1
    %717 = vsyncpa %s716, 1
    %718 = vsyncpa [#allocation6], 1
    %s719 = scalar_lea.sflag [#allocation6], 1
    %720 = vsyncpa %s719, 1
    %721 = vsyncpa [#allocation9], 1
    %s722 = scalar_lea.sflag [#allocation9], 1
    %723 = vsyncpa %s722, 1
    %724 = vsyncpa [#allocation4], 1
    %s725 = scalar_lea.sflag [#allocation4], 1
    %726 = vsyncpa %s725, 1
    %727 = vsyncpa [#allocation12], 1
    %s728 = scalar_lea.sflag [#allocation12], 1
    %729 = vsyncpa %s728, 1

</llo_original>
